<compile_context>
chip_gen: v5e
topology: v5e:2x2
jax: 0.10.0
libtpu: 0.0.40
codegen_flags: <defaults>
</compile_context>

<pallas_src>
import jax
import jax.numpy as jnp
from jax.experimental import pallas as pl
from jax.experimental.pallas import tpu as pltpu

LEAK = 0.2
FILTER_SIZES = (2, 4, 6, 8)
NUM_FILTERS = (64, 64, 64, 64)
MAX_F = FILTER_SIZES[-1]
FEAT = sum(NUM_FILTERS)            # 256 = 2 x 128 lanes (lane-dense feature)
HID = 64
HID_PAD = 128                      # lane-padded hidden dim
NUM_CLASSES = 3                    # 2 + 1
PAD_C = 128                        # lane-padded class dim -> unmasked stores
PROB_OFF = 64                      # probs live in output lanes [64, 64+3)
NEG_BIG = -1e30                    # Python float -> inline literal, not a const

_VMEM_LIMIT_BYTES = 32 * 1024 * 1024    # explicit scoped-VMEM limit (all chips)
_VMEM_BUDGET_BYTES = 20 * 1024 * 1024   # per-step resident target w/ headroom


def _leaky(x):
    return jnp.where(x > 0, x, LEAK * x)


# ------------------------------ fused kernel --------------------------------

def _disc_kernel(x_ref, wc_ref, bc_ref, mask_ref, w1_ref, b1_ref, w2_ref,
                 b2_ref, out_ref):
    """Whole Discriminator forward for one batch tile.

    x:    (TB, S_pad, E) bf16 zero-padded embeddings
    wc:   (MAX_F*E, 256) bf16 packed conv weights (rows for shift >= f are 0)
    bc:   (1, 256) f32 packed conv biases
    mask: (S, 256) f32 additive positional mask (0 valid / -1e30 invalid)
    w1:   (256, 128) bf16 (cols >= 64 zero)   b1: (1, 128) f32
    w2:   (128, 128) bf16 (real class cols at 0..2 and duplicated at 64..66)
    b2:   (1, 128) f32 (same duplication)
    out:  (TB, 128) f32: lanes 0..2 = logits, lanes 64..66 = softmax probs
    """
    x = x_ref[...]
    tb = x.shape[0]
    e = x.shape[-1]
    p = mask_ref.shape[0]                 # number of conv positions kept (= S)

    # Folded im2col: window row i lands in lanes [i*E, (i+1)*E).  One K=8*E
    # matmul replaces eight K=E matmuls + accumulator read-modify-write.
    xw = jnp.concatenate([x[:, i:i + p, :] for i in range(MAX_F)], axis=-1)
    xw = xw.reshape(tb * p, MAX_F * e)    # 2-D MXU operand

    s = jnp.dot(xw, wc_ref[...], preferred_element_type=jnp.float32)
    s = _leaky(s + bc_ref[...])           # bias + LeakyReLU(0.2), all f32
    # Mask positions past each filter group's valid conv length, then the
    # global max-pool over positions yields the concatenated (TB, 256) feature.
    s = s.reshape(tb, p, FEAT) + mask_ref[...][None]
    feature = jnp.max(s, axis=1)          # (TB, 256)

    # feature2out head (hidden dim lane-padded to 128; pad lanes stay 0).
    h = _leaky(jnp.dot(feature.astype(jnp.bfloat16), w1_ref[...],
                       preferred_element_type=jnp.float32) + b1_ref[...])
    logits = jnp.dot(h.astype(jnp.bfloat16), w2_ref[...],
                     preferred_element_type=jnp.float32) + b2_ref[...]

    # Real logits sit in lanes 0..2 and are duplicated at lanes 64..66 via the
    # packed weight columns: exact softmax on the duplicate, then pack logits
    # and probs into a single lane-dense 128-wide row (one unmasked store).
    cls = jax.lax.broadcasted_iota(jnp.int32, logits.shape, 1)
    is_lo = cls < NUM_CLASSES
    is_hi = jnp.logical_and(cls >= PROB_OFF, cls < PROB_OFF + NUM_CLASSES)
    masked = jnp.where(is_hi, logits, NEG_BIG)
    m = jnp.max(masked, axis=-1, keepdims=True)
    ex = jnp.exp(masked - m)              # exactly 0 outside the probs lanes
    probs = ex / jnp.sum(ex, axis=-1, keepdims=True)   # exact normalization
    out_ref[...] = jnp.where(is_lo, logits, 0.0) + probs


# -------------------------------- wrapper ------------------------------------

def _vmem_bytes(tb, n_pos, s_pad, e):
    """Rough per-grid-step VMEM resident estimate (double-buffered IO)."""
    x_in = 2 * tb * s_pad * e * 2                  # bf16 input block x2 buffers
    xw = tb * n_pos * MAX_F * e * 2                # folded bf16 matmul LHS
    s32 = 2 * tb * n_pos * FEAT * 4                # f32 scores (+ masked copy)
    out = 2 * tb * PAD_C * 4                       # packed output x2 buffers
    wts = (MAX_F * e * FEAT + FEAT * HID_PAD + HID_PAD * PAD_C) * 2 \
        + (FEAT + n_pos * FEAT + HID_PAD + PAD_C) * 4
    misc = tb * (FEAT + 2 * HID_PAD + 4 * PAD_C) * 4
    return x_in + xw + s32 + out + wts + misc


def _pick_batch_tile(batch, n_pos, s_pad, e):
    """VMEM- and grid-aware batch tile: fit the budget, prefer >= 2 steps."""
    cands = [t for t in (1024, 512, 256, 128, 64, 32, 16, 8) if batch % t == 0]
    if not cands:
        return batch
    fits = [t for t in cands if _vmem_bytes(t, n_pos, s_pad, e) <= _VMEM_BUDGET_BYTES]
    if not fits:
        return cands[-1]
    pipelined = [t for t in fits if batch // t >= 2]
    return pipelined[0] if pipelined else fits[0]


def discriminator_forward(params, inps):
    """inps: (B, S, emb_size) f32 -> (logits (B,3), probs (B,3))."""
    B, S, E = inps.shape
    assert S >= MAX_F, "sequence must be at least as long as the widest filter"
    wc, bc = params["wc"], params["bc"]
    w1, b1 = params["w1"], params["b1"]
    w2, b2 = params["w2"], params["b2"]
    assert wc.shape == (MAX_F * E, FEAT)

    # bf16 input (halves input HBM DMA; the matmul consumes bf16 anyway),
    # zero-padded once here so every in-kernel row shift is in range.
    s_pad = ((S + MAX_F - 1 + 7) // 8) * 8
    x = jnp.pad(inps.astype(jnp.bfloat16), ((0, 0), (0, s_pad - S), (0, 0)))

    # Precomputed additive positional mask: position l is valid for a feature
    # column of filter size f iff l <= S - f (valid-conv length S - f + 1).
    fsz = jnp.concatenate([jnp.full((n,), f, jnp.int32)
                           for f, n in zip(FILTER_SIZES, NUM_FILTERS)])
    mask = jnp.where(jnp.arange(S)[:, None] <= (S - fsz)[None, :],
                     0.0, NEG_BIG).astype(jnp.float32)          # (S, FEAT)

    TB = _pick_batch_tile(B, S, s_pad, E)
    grid = (B // TB,)

    packed = pl.pallas_call(
        _disc_kernel,
        out_shape=jax.ShapeDtypeStruct((B, PAD_C), jnp.float32),
        grid_spec=pltpu.PrefetchScalarGridSpec(
            num_scalar_prefetch=0,
            grid=grid,
            in_specs=[
                pl.BlockSpec((TB, s_pad, E), lambda b: (b, 0, 0)),
                pl.BlockSpec((MAX_F * E, FEAT), lambda b: (0, 0)),
                pl.BlockSpec((1, FEAT), lambda b: (0, 0)),
                pl.BlockSpec((S, FEAT), lambda b: (0, 0)),
                pl.BlockSpec((FEAT, HID_PAD), lambda b: (0, 0)),
                pl.BlockSpec((1, HID_PAD), lambda b: (0, 0)),
                pl.BlockSpec((HID_PAD, PAD_C), lambda b: (0, 0)),
                pl.BlockSpec((1, PAD_C), lambda b: (0, 0)),
            ],
            out_specs=pl.BlockSpec((TB, PAD_C), lambda b: (b, 0)),
        ),
        compiler_params=pltpu.CompilerParams(
            dimension_semantics=("parallel",),
            vmem_limit_bytes=_VMEM_LIMIT_BYTES),
    )(x, wc, bc, mask, w1, b1, w2, b2)

    # TODO(synk): nn.Dropout is inference-mode identity here (no RNG dropout).
    logits = packed[:, :NUM_CLASSES]
    probs = packed[:, PROB_OFF:PROB_OFF + NUM_CLASSES]
    return logits, probs


# ----------------------------- parameter setup -------------------------------

def spectral_normalize(w2d, iters=30):
    """Plain-JAX glue mimicking nn.utils.spectral_norm: W / sigma_max(W)."""
    # TODO(synk): PyTorch runs 1 power iteration per forward with persistent
    # u/v buffers; here it is applied once at init.
    u = jnp.ones((w2d.shape[0],), w2d.dtype) / jnp.sqrt(float(w2d.shape[0]))
    v = None
    for _ in range(iters):
        v = w2d.T @ u
        v = v / (jnp.linalg.norm(v) + 1e-12)
        u = w2d @ v
        u = u / (jnp.linalg.norm(u) + 1e-12)
    sigma = u @ (w2d @ v)
    return w2d / sigma


def init_params(key, emb):
    keys = jax.random.split(key, 2 * len(FILTER_SIZES) + 4)
    ki = 0
    raw_convs = []
    wc = jnp.zeros((MAX_F * emb, FEAT), jnp.float32)
    bc = jnp.zeros((1, FEAT), jnp.float32)
    off = 0
    for f, n in zip(FILTER_SIZES, NUM_FILTERS):
        w = jax.random.normal(keys[ki], (n, f * emb), jnp.float32) * 0.05
        ki += 1
        w = spectral_normalize(w)                     # SN(Conv2d)
        b = jax.random.normal(keys[ki], (n,), jnp.float32) * 0.05
        ki += 1
        wg = w.reshape(n, f, emb)                     # PyTorch (n,1,f,E) squeezed
        raw_convs.append((wg, b))
        # packed weight: wc[i*emb + e, off + n] = wg[n, i, e] for shift i < f
        blk = jnp.transpose(wg, (1, 2, 0)).reshape(f * emb, n)
        wc = wc.at[:f * emb, off:off + n].set(blk)
        bc = bc.at[0, off:off + n].set(b)
        off += n

    w1 = spectral_normalize(
        jax.random.normal(keys[ki], (HID, FEAT), jnp.float32) * 0.05)
    ki += 1
    b1 = jax.random.normal(keys[ki], (HID,), jnp.float32) * 0.05
    ki += 1
    w2 = spectral_normalize(
        jax.random.normal(keys[ki], (NUM_CLASSES, HID), jnp.float32) * 0.05)
    ki += 1
    b2 = jax.random.normal(keys[ki], (NUM_CLASSES,), jnp.float32) * 0.05

    w1_pad = jnp.zeros((FEAT, HID_PAD), jnp.float32).at[:, :HID].set(w1.T)
    b1_pad = jnp.zeros((1, HID_PAD), jnp.float32).at[0, :HID].set(b1)
    # real class columns at lanes 0..2 (logits) and duplicated at 64..66 so the
    # kernel can run an exact softmax on the duplicate and pack both outputs.
    w2_pad = jnp.zeros((HID_PAD, PAD_C), jnp.float32)
    w2_pad = w2_pad.at[:HID, :NUM_CLASSES].set(w2.T)
    w2_pad = w2_pad.at[:HID, PROB_OFF:PROB_OFF + NUM_CLASSES].set(w2.T)
    b2_pad = jnp.zeros((1, PAD_C), jnp.float32)
    b2_pad = b2_pad.at[0, :NUM_CLASSES].set(b2)
    b2_pad = b2_pad.at[0, PROB_OFF:PROB_OFF + NUM_CLASSES].set(b2)

    params = dict(
        wc=wc.astype(jnp.bfloat16),   # matmul operands in bf16 (f32 accumulate)
        bc=bc,                        # pointwise math stays f32 (v5e-safe)
        w1=w1_pad.astype(jnp.bfloat16),
        b1=b1_pad,
        w2=w2_pad.astype(jnp.bfloat16),
        b2=b2_pad,
    )
    raw = dict(convs=raw_convs, w1=w1, b1=b1, w2=w2, b2=b2)
    return params, raw


# --------------------------- pure-JAX reference -------------------------------

def reference_forward(raw, x):
    """Naive per-filter reference (mirrors the kernel's bf16 matmul inputs)."""
    B, S, E = x.shape
    r = lambda a: a.astype(jnp.bfloat16).astype(jnp.float32)
    hi = jax.lax.Precision.HIGHEST
    pools = []
    for f, (wg, bg) in zip(FILTER_SIZES, raw["convs"]):
        L = S - f + 1
        windows = jnp.stack([x[:, i:i + L, :] for i in range(f)], axis=2)
        patches = windows.reshape(B, L, f * E)
        wmat = wg.reshape(wg.shape[0], f * E).T
        s = jnp.einsum("blk,kn->bln", r(patches), r(wmat), precision=hi) + bg
        s = jnp.where(s > 0, s, LEAK * s)
        pools.append(jnp.max(s, axis=1))
    feat = jnp.concatenate(pools, axis=1)
    h = jnp.dot(r(feat), r(raw["w1"].T), precision=hi) + raw["b1"]
    h = jnp.where(h > 0, h, LEAK * h)
    logits = jnp.dot(r(h), r(raw["w2"].T), precision=hi) + raw["b2"]
    probs = jax.nn.softmax(logits, axis=-1)
    return logits, probs


# ---------------------------------- main --------------------------------------

if __name__ == "__main__":
    B, S, EMB = 2, 16, 32            # batch, seq_len, hps.emb_size
    key = jax.random.PRNGKey(0)
    k_param, k_inp = jax.random.split(key)
    params, raw = init_params(k_param, EMB)
    inps = jax.random.normal(k_inp, (B, S, EMB), jnp.float32)

    logits, probs = jax.jit(discriminator_forward)(params, inps)
    jax.block_until_ready((logits, probs))

    assert logits.shape == (B, NUM_CLASSES) and probs.shape == (B, NUM_CLASSES)
    assert bool(jnp.all(jnp.isfinite(logits))) and bool(jnp.all(jnp.isfinite(probs)))
    assert bool(jnp.allclose(jnp.sum(probs, axis=-1), 1.0, atol=1e-3))

    ref_logits, ref_probs = reference_forward(raw, inps)
    assert bool(jnp.allclose(logits, ref_logits, atol=2e-2, rtol=2e-2))
    assert bool(jnp.allclose(probs, ref_probs, atol=2e-2))

    print("KERNEL_OK")
</pallas_src>

<mosaic_0001>
module attributes {stable_mosaic.version = 11 : i64} {
  func.func @_disc_kernel(%arg0: i32, %arg1: memref<2x24x32xbf16, #tpu.memory_space<vmem>>, %arg2: memref<256x256xbf16, #tpu.memory_space<vmem>>, %arg3: memref<1x256xf32, #tpu.memory_space<vmem>>, %arg4: memref<16x256xf32, #tpu.memory_space<vmem>>, %arg5: memref<256x128xbf16, #tpu.memory_space<vmem>>, %arg6: memref<1x128xf32, #tpu.memory_space<vmem>>, %arg7: memref<128x128xbf16, #tpu.memory_space<vmem>>, %arg8: memref<1x128xf32, #tpu.memory_space<vmem>>, %arg9: memref<2x128xf32, #tpu.memory_space<vmem>>) attributes {dimension_semantics = [#tpu.dimension_semantics<parallel>], iteration_bounds = array<i64: 1>, scalar_prefetch = 0 : i64, scratch_operands = 0 : i64, tpu.core_type = #tpu.core_type<tc>, window_params = [{transform_indices = @transform_0, window_bounds = array<i64: 2, 24, 32>}, {pipeline_mode = #tpu.pipeline_mode<synchronous>, transform_indices = @transform_1, window_bounds = array<i64: 256, 256>}, {pipeline_mode = #tpu.pipeline_mode<synchronous>, transform_indices = @transform_2, window_bounds = array<i64: 1, 256>}, {pipeline_mode = #tpu.pipeline_mode<synchronous>, transform_indices = @transform_3, window_bounds = array<i64: 16, 256>}, {pipeline_mode = #tpu.pipeline_mode<synchronous>, transform_indices = @transform_4, window_bounds = array<i64: 256, 128>}, {pipeline_mode = #tpu.pipeline_mode<synchronous>, transform_indices = @transform_5, window_bounds = array<i64: 1, 128>}, {pipeline_mode = #tpu.pipeline_mode<synchronous>, transform_indices = @transform_6, window_bounds = array<i64: 128, 128>}, {pipeline_mode = #tpu.pipeline_mode<synchronous>, transform_indices = @transform_7, window_bounds = array<i64: 1, 128>}, {transform_indices = @transform_8, window_bounds = array<i64: 2, 128>}]} {
    %c0 = arith.constant 0 : index
    %c0_0 = arith.constant 0 : index
    %c0_1 = arith.constant 0 : index
    %0 = vector.load %arg1[%c0, %c0_0, %c0_1] : memref<2x24x32xbf16, #tpu.memory_space<vmem>>, vector<2x24x32xbf16>
    %1 = vector.extract_strided_slice %0 {offsets = [0, 0, 0], sizes = [2, 16, 32], strides = [1, 1, 1]} : vector<2x24x32xbf16> to vector<2x16x32xbf16>
    %2 = vector.extract_strided_slice %0 {offsets = [0, 1, 0], sizes = [2, 16, 32], strides = [1, 1, 1]} : vector<2x24x32xbf16> to vector<2x16x32xbf16>
    %3 = vector.extract_strided_slice %0 {offsets = [0, 2, 0], sizes = [2, 16, 32], strides = [1, 1, 1]} : vector<2x24x32xbf16> to vector<2x16x32xbf16>
    %4 = vector.extract_strided_slice %0 {offsets = [0, 3, 0], sizes = [2, 16, 32], strides = [1, 1, 1]} : vector<2x24x32xbf16> to vector<2x16x32xbf16>
    %5 = vector.extract_strided_slice %0 {offsets = [0, 4, 0], sizes = [2, 16, 32], strides = [1, 1, 1]} : vector<2x24x32xbf16> to vector<2x16x32xbf16>
    %6 = vector.extract_strided_slice %0 {offsets = [0, 5, 0], sizes = [2, 16, 32], strides = [1, 1, 1]} : vector<2x24x32xbf16> to vector<2x16x32xbf16>
    %7 = vector.extract_strided_slice %0 {offsets = [0, 6, 0], sizes = [2, 16, 32], strides = [1, 1, 1]} : vector<2x24x32xbf16> to vector<2x16x32xbf16>
    %8 = vector.extract_strided_slice %0 {offsets = [0, 7, 0], sizes = [2, 16, 32], strides = [1, 1, 1]} : vector<2x24x32xbf16> to vector<2x16x32xbf16>
    %9 = tpu.concatenate %1, %2, %3, %4, %5, %6, %7, %8 in 2 : vector<2x16x32xbf16>, vector<2x16x32xbf16>, vector<2x16x32xbf16>, vector<2x16x32xbf16>, vector<2x16x32xbf16>, vector<2x16x32xbf16>, vector<2x16x32xbf16>, vector<2x16x32xbf16> -> vector<2x16x256xbf16>
    %10 = vector.shape_cast %9 : vector<2x16x256xbf16> to vector<32x256xbf16>
    %c0_2 = arith.constant 0 : index
    %c0_3 = arith.constant 0 : index
    %11 = vector.load %arg2[%c0_2, %c0_3] : memref<256x256xbf16, #tpu.memory_space<vmem>>, vector<256x256xbf16>
    %cst = arith.constant dense<0.000000e+00> : vector<32x256xf32>
    %12 = tpu.matmul %10, %11, %cst {dimension_numbers = #tpu.dot_dimension_numbers<[1], [0], [0], [1], [0, 0, 1, 1], [], []>} : vector<32x256xbf16>, vector<256x256xbf16>, vector<32x256xf32> -> vector<32x256xf32>
    %c0_4 = arith.constant 0 : index
    %c0_5 = arith.constant 0 : index
    %13 = vector.load %arg3[%c0_4, %c0_5] : memref<1x256xf32, #tpu.memory_space<vmem>>, vector<1x256xf32>
    %14 = vector.broadcast %13 : vector<1x256xf32> to vector<32x256xf32>
    %15 = arith.addf %12, %14 : vector<32x256xf32>
    %cst_6 = arith.constant 0.000000e+00 : f32
    %16 = vector.broadcast %cst_6 : f32 to vector<32x256xf32>
    %17 = arith.cmpf ogt, %15, %16 : vector<32x256xf32>
    %cst_7 = arith.constant 2.000000e-01 : f32
    %18 = vector.broadcast %cst_7 : f32 to vector<32x256xf32>
    %19 = arith.mulf %18, %15 : vector<32x256xf32>
    %20 = arith.select %17, %15, %19 : vector<32x256xi1>, vector<32x256xf32>
    %21 = vector.shape_cast %20 : vector<32x256xf32> to vector<2x16x256xf32>
    %c0_8 = arith.constant 0 : index
    %c0_9 = arith.constant 0 : index
    %22 = vector.load %arg4[%c0_8, %c0_9] : memref<16x256xf32, #tpu.memory_space<vmem>>, vector<16x256xf32>
    %23 = vector.shape_cast %22 : vector<16x256xf32> to vector<1x16x256xf32>
    %24 = vector.broadcast %23 : vector<1x16x256xf32> to vector<2x16x256xf32>
    %25 = arith.addf %21, %24 : vector<2x16x256xf32>
    %cst_10 = arith.constant dense<0xFF800000> : vector<2x256xf32>
    %26 = vector.multi_reduction <maximumf>, %25, %cst_10 [1] : vector<2x16x256xf32> to vector<2x256xf32>
    %27 = arith.truncf %26 : vector<2x256xf32> to vector<2x256xbf16>
    %c0_11 = arith.constant 0 : index
    %c0_12 = arith.constant 0 : index
    %28 = vector.load %arg5[%c0_11, %c0_12] : memref<256x128xbf16, #tpu.memory_space<vmem>>, vector<256x128xbf16>
    %cst_13 = arith.constant dense<0.000000e+00> : vector<2x128xf32>
    %29 = tpu.matmul %27, %28, %cst_13 {dimension_numbers = #tpu.dot_dimension_numbers<[1], [0], [0], [1], [0, 0, 1, 1], [], []>} : vector<2x256xbf16>, vector<256x128xbf16>, vector<2x128xf32> -> vector<2x128xf32>
    %c0_14 = arith.constant 0 : index
    %c0_15 = arith.constant 0 : index
    %30 = vector.load %arg6[%c0_14, %c0_15] : memref<1x128xf32, #tpu.memory_space<vmem>>, vector<1x128xf32>
    %31 = vector.broadcast %30 : vector<1x128xf32> to vector<2x128xf32>
    %32 = arith.addf %29, %31 : vector<2x128xf32>
    %cst_16 = arith.constant 0.000000e+00 : f32
    %33 = vector.broadcast %cst_16 : f32 to vector<2x128xf32>
    %34 = arith.cmpf ogt, %32, %33 : vector<2x128xf32>
    %cst_17 = arith.constant 2.000000e-01 : f32
    %35 = vector.broadcast %cst_17 : f32 to vector<2x128xf32>
    %36 = arith.mulf %35, %32 : vector<2x128xf32>
    %37 = arith.select %34, %32, %36 : vector<2x128xi1>, vector<2x128xf32>
    %38 = arith.truncf %37 : vector<2x128xf32> to vector<2x128xbf16>
    %c0_18 = arith.constant 0 : index
    %c0_19 = arith.constant 0 : index
    %39 = vector.load %arg7[%c0_18, %c0_19] : memref<128x128xbf16, #tpu.memory_space<vmem>>, vector<128x128xbf16>
    %cst_20 = arith.constant dense<0.000000e+00> : vector<2x128xf32>
    %40 = tpu.matmul %38, %39, %cst_20 {dimension_numbers = #tpu.dot_dimension_numbers<[1], [0], [0], [1], [0, 0, 1, 1], [], []>} : vector<2x128xbf16>, vector<128x128xbf16>, vector<2x128xf32> -> vector<2x128xf32>
    %c0_21 = arith.constant 0 : index
    %c0_22 = arith.constant 0 : index
    %41 = vector.load %arg8[%c0_21, %c0_22] : memref<1x128xf32, #tpu.memory_space<vmem>>, vector<1x128xf32>
    %42 = vector.broadcast %41 : vector<1x128xf32> to vector<2x128xf32>
    %43 = arith.addf %40, %42 : vector<2x128xf32>
    %44 = tpu.iota {dimensions = array<i32: 1>} : vector<2x128xi32>
    %c3_i32 = arith.constant 3 : i32
    %45 = vector.broadcast %c3_i32 : i32 to vector<2x128xi32>
    %46 = arith.cmpi slt, %44, %45 : vector<2x128xi32>
    %c64_i32 = arith.constant 64 : i32
    %47 = vector.broadcast %c64_i32 : i32 to vector<2x128xi32>
    %48 = arith.cmpi sge, %44, %47 : vector<2x128xi32>
    %c67_i32 = arith.constant 67 : i32
    %49 = vector.broadcast %c67_i32 : i32 to vector<2x128xi32>
    %50 = arith.cmpi slt, %44, %49 : vector<2x128xi32>
    %51 = arith.andi %48, %50 : vector<2x128xi1>
    %cst_23 = arith.constant -1.000000e+30 : f32
    %52 = vector.broadcast %cst_23 : f32 to vector<2x128xf32>
    %53 = arith.select %51, %43, %52 : vector<2x128xi1>, vector<2x128xf32>
    %cst_24 = arith.constant dense<0xFF800000> : vector<2xf32>
    %54 = vector.multi_reduction <maximumf>, %53, %cst_24 [1] : vector<2x128xf32> to vector<2xf32>
    %55 = vector.shape_cast %54 : vector<2xf32> to vector<2x1xf32>
    %56 = vector.broadcast %55 : vector<2x1xf32> to vector<2x128xf32>
    %57 = arith.subf %53, %56 : vector<2x128xf32>
    %58 = math.exp %57 : vector<2x128xf32>
    %cst_25 = arith.constant dense<0.000000e+00> : vector<2xf32>
    %59 = vector.multi_reduction <add>, %58, %cst_25 [1] : vector<2x128xf32> to vector<2xf32>
    %60 = vector.shape_cast %59 : vector<2xf32> to vector<2x1xf32>
    %61 = vector.broadcast %60 : vector<2x1xf32> to vector<2x128xf32>
    %62 = arith.divf %58, %61 : vector<2x128xf32>
    %cst_26 = arith.constant 0.000000e+00 : f32
    %63 = vector.broadcast %cst_26 : f32 to vector<2x128xf32>
    %64 = arith.select %46, %43, %63 : vector<2x128xi1>, vector<2x128xf32>
    %65 = arith.addf %64, %62 : vector<2x128xf32>
    %c0_27 = arith.constant 0 : index
    %c0_28 = arith.constant 0 : index
    %66 = vector.load %arg9[%c0_27, %c0_28] : memref<2x128xf32, #tpu.memory_space<vmem>>, vector<2x128xf32>
    tpu.vector_store %arg9[%c0_27, %c0_28], %65 {strides = array<i32>} : memref<2x128xf32, #tpu.memory_space<vmem>>, vector<2x128xf32>,
    return
  }
  func.func @transform_0(%arg0: i32) -> (i32, i32, i32) {
    %c0_i32 = arith.constant 0 : i32
    %c0_i32_0 = arith.constant 0 : i32
    %c0_i32_1 = arith.constant 0 : i32
    return %arg0, %c0_i32, %c0_i32_0 : i32, i32, i32
  }
  func.func @transform_1(%arg0: i32) -> (i32, i32) {
    %c0_i32 = arith.constant 0 : i32
    %c0_i32_0 = arith.constant 0 : i32
    %c0_i32_1 = arith.constant 0 : i32
    return %c0_i32, %c0_i32_0 : i32, i32
  }
  func.func @transform_2(%arg0: i32) -> (i32, i32) {
    %c0_i32 = arith.constant 0 : i32
    %c0_i32_0 = arith.constant 0 : i32
    %c0_i32_1 = arith.constant 0 : i32
    return %c0_i32, %c0_i32_0 : i32, i32
  }
  func.func @transform_3(%arg0: i32) -> (i32, i32) {
    %c0_i32 = arith.constant 0 : i32
    %c0_i32_0 = arith.constant 0 : i32
    %c0_i32_1 = arith.constant 0 : i32
    return %c0_i32, %c0_i32_0 : i32, i32
  }
  func.func @transform_4(%arg0: i32) -> (i32, i32) {
    %c0_i32 = arith.constant 0 : i32
    %c0_i32_0 = arith.constant 0 : i32
    %c0_i32_1 = arith.constant 0 : i32
    return %c0_i32, %c0_i32_0 : i32, i32
  }
  func.func @transform_5(%arg0: i32) -> (i32, i32) {
    %c0_i32 = arith.constant 0 : i32
    %c0_i32_0 = arith.constant 0 : i32
    %c0_i32_1 = arith.constant 0 : i32
    return %c0_i32, %c0_i32_0 : i32, i32
  }
  func.func @transform_6(%arg0: i32) -> (i32, i32) {
    %c0_i32 = arith.constant 0 : i32
    %c0_i32_0 = arith.constant 0 : i32
    %c0_i32_1 = arith.constant 0 : i32
    return %c0_i32, %c0_i32_0 : i32, i32
  }
  func.func @transform_7(%arg0: i32) -> (i32, i32) {
    %c0_i32 = arith.constant 0 : i32
    %c0_i32_0 = arith.constant 0 : i32
    %c0_i32_1 = arith.constant 0 : i32
    return %c0_i32, %c0_i32_0 : i32, i32
  }
  func.func @transform_8(%arg0: i32) -> (i32, i32) {
    %c0_i32 = arith.constant 0 : i32
    %c0_i32_0 = arith.constant 0 : i32
    return %arg0, %c0_i32 : i32, i32
  }
}

</mosaic_0001>

<llo_original>
// kernel: discriminator_forward.1
$region0: #{discriminator_forward.1}
  #allocation0 [shape = 'u32[]', space=smem, size = 0x4, offset = 0x4, fixed_abs, tag = 'smem constant byte address 0x4 - core index']
  #allocation1 [shape = 'u32[72,128]{1,0:T(1,128)}', space=vmem, size = 0x9000, scoped, tag = 'internal scratch']
  %s0 = inlined_call_operand.vmem [shape: bf16[2,24,32], index: 0, kind: input, shape index: {}]
  %s1 = inlined_call_operand.hbm [shape: bf16[256,256], index: 1, kind: input, shape index: {}]
  %s2 = inlined_call_operand.vmem [shape: f32[1,256], index: 2, kind: input, shape index: {}]
  %s3 = inlined_call_operand.vmem [shape: f32[16,256], index: 3, kind: input, shape index: {}]
  %s4 = inlined_call_operand.hbm [shape: bf16[256,128], index: 4, kind: input, shape index: {}]
  %s5 = inlined_call_operand.vmem [shape: f32[1,128], index: 5, kind: input, shape index: {}]
  %s6 = inlined_call_operand.vmem [shape: bf16[128,128], index: 6, kind: input, shape index: {}]
  %s7 = inlined_call_operand.vmem [shape: f32[1,128], index: 7, kind: input, shape index: {}]
  %s8 = inlined_call_operand.vmem [shape: f32[2,128], index: 8, kind: output, shape index: {}]
  %s9 = sld [smem:[#allocation0]]
  $region50: #{discriminator_forward.1} parent=0
    _
  %s11 = ssub.s32 1, %s9
  %s12 = scalar_select 0, %s11, %s9
  $region1: #{discriminator_forward.1} parent=0
    #allocation2 [shape = 'u8[131072]{0}', space=vmem, size = 0x20000, scoped, tag = 'input window, operand 1, single buffered']
    #allocation3 [shape = 's32[1]{0}', space=sflag, size = 0x4, scoped, tag = 'scoped memory for discriminator_forward.1']
    #allocation4 [shape = 'u8[65536]{0}', space=vmem, size = 0x10000, scoped, tag = 'input window, operand 4, single buffered']
    #allocation5 [shape = 's32[1]{0}', space=sflag, size = 0x4, scoped, tag = 'scoped memory for discriminator_forward.1']
    %13 = vsyncpa [#allocation3], 0
    %14 = vsyncpa [#allocation5], 0
    // Predicated region
    $region2: #{discriminator_forward.1} parent=1 // pred_check
      _
    $region3: #{discriminator_forward.1} parent=1 // pred_check_branch
      %16 = sbr.rel (0) target = $region5
    $region4: #{discriminator_forward.1} parent=1 // pred_region
      _
    $region5: #{discriminator_forward.1} parent=1 // pred_fallthru
      _
    // Predicated region
    $region6: #{discriminator_forward.1} parent=1 // pred_check
      _
    $region7: #{discriminator_forward.1} parent=1 // pred_check_branch
      %18 = sbr.rel (0) target = $region9
    $region8: #{discriminator_forward.1} parent=1 // pred_region
      %20 = vsyncadd [#allocation3], 0
      %s21 = sshll.u32 %s1, 4
      %s22 = int_to_ptr.hbm [resolvable:$true] %s21
      %s23 = sshll.u32 [#allocation2], 4
      %s24 = int_to_ptr.vmem [resolvable:$true] %s23
      %29 = dma.hbm_to_vmem [thread:$0]  %s22, 4096, %s24, [#allocation3], 128, 128, 8
    $region9: #{discriminator_forward.1} parent=1 // pred_fallthru
      _
    // Predicated region
    $region10: #{discriminator_forward.1} parent=1 // pred_check
      _
    $region11: #{discriminator_forward.1} parent=1 // pred_check_branch
      %31 = sbr.rel (0) target = $region13
    $region12: #{discriminator_forward.1} parent=1 // pred_region
      _
    $region13: #{discriminator_forward.1} parent=1 // pred_fallthru
      _
    // Predicated region
    $region14: #{discriminator_forward.1} parent=1 // pred_check
      _
    $region15: #{discriminator_forward.1} parent=1 // pred_check_branch
      %33 = sbr.rel (0) target = $region17
    $region16: #{discriminator_forward.1} parent=1 // pred_region
      _
    $region17: #{discriminator_forward.1} parent=1 // pred_fallthru
      _
    // Predicated region
    $region18: #{discriminator_forward.1} parent=1 // pred_check
      _
    $region19: #{discriminator_forward.1} parent=1 // pred_check_branch
      %35 = sbr.rel (0) target = $region21
    $region20: #{discriminator_forward.1} parent=1 // pred_region
      %37 = vsyncadd [#allocation5], 0
      %s38 = sshll.u32 %s4, 4
      %s39 = int_to_ptr.hbm [resolvable:$true] %s38
      %s40 = sshll.u32 [#allocation4], 4
      %s41 = int_to_ptr.vmem [resolvable:$true] %s40
      %46 = dma.hbm_to_vmem [thread:$0]  %s39, 2048, %s41, [#allocation5], 64, 64, 4
    $region21: #{discriminator_forward.1} parent=1 // pred_fallthru
      _
    // Predicated region
    $region22: #{discriminator_forward.1} parent=1 // pred_check
      _
    $region23: #{discriminator_forward.1} parent=1 // pred_check_branch
      %48 = sbr.rel (0) target = $region25
    $region24: #{discriminator_forward.1} parent=1 // pred_region
      _
    $region25: #{discriminator_forward.1} parent=1 // pred_fallthru
      _
    // Predicated region
    $region26: #{discriminator_forward.1} parent=1 // pred_check
      _
    $region27: #{discriminator_forward.1} parent=1 // pred_check_branch
      %50 = sbr.rel (0) target = $region29
    $region28: #{discriminator_forward.1} parent=1 // pred_region
      _
    $region29: #{discriminator_forward.1} parent=1 // pred_fallthru
      _
    // Predicated region
    $region30: #{discriminator_forward.1} parent=1 // pred_check
      _
    $region31: #{discriminator_forward.1} parent=1 // pred_check_branch
      %52 = sbr.rel (0) target = $region33
    $region32: #{discriminator_forward.1} parent=1 // pred_region
      _
    $region33: #{discriminator_forward.1} parent=1 // pred_fallthru
      _
    // Predicated region
    $region34: #{discriminator_forward.1} parent=1 // pred_check
      _
    $region35: #{discriminator_forward.1} parent=1 // pred_check_branch
      %54 = sbr.rel (0) target = $region37
    $region36: #{discriminator_forward.1} parent=1 // pred_region
      %56 = dma.done [#allocation3], 4096
    $region37: #{discriminator_forward.1} parent=1 // pred_fallthru
      _
    // Predicated region
    $region38: #{discriminator_forward.1} parent=1 // pred_check
      _
    $region39: #{discriminator_forward.1} parent=1 // pred_check_branch
      %58 = sbr.rel (0) target = $region41
    $region40: #{discriminator_forward.1} parent=1 // pred_region
      %60 = dma.done [#allocation5], 2048
    $region41: #{discriminator_forward.1} parent=1 // pred_fallthru
      _
    %v61 = vld [vmem:[%s0] sm:$0xf]
    %v62 = vld [vmem:[%s0 + $0x4] sm:$0xf]
    %v63 = vld [vmem:[%s0 + $0x8] sm:$0xf]
    %v64 = vld [vmem:[%s0 + $0xc] sm:$0xf]
    %v65 = vld [vmem:[%s0 + $0x10] sm:$0xf]
    %v66 = vld [vmem:[%s0 + $0x14] sm:$0xf]
    %v71 = vunpack.c.l.b16 %v61
    %v72 = vunpack.c.l.b16 %v62
    %v73 = vunpack.c.l.b16 %v64
    %v74 = vunpack.c.l.b16 %v65
    %v75 = vpack.c.b16 %v72, %v71
    %v76 = vpack.c.b16 %v74, %v73
    %v79 = vunpack.c.l.b16 %v63
    %v80 = vunpack.c.l.b16 %v66
    %v81 = vpack.c.b16 %v79, %v79
    %v82 = vpack.c.b16 %v80, %v80
    %vm83 = vsmask.f32 7424
    %v85 = vshrl.u32 %v75, 16
    %v87 = vshll.u32 %v75, 16
    %v89 = vrot.slane %v87, 1
    %v90 = vor.u32 %v85, %v89
    %v92 = vshll.u32 %v81, 16
    %v94 = vrot.slane %v92, 1
    %v95 = vsel %vm83, %v90, %v94
    %v97 = vshrl.u32 %v76, 16
    %v99 = vshll.u32 %v76, 16
    %v101 = vrot.slane %v99, 1
    %v102 = vor.u32 %v97, %v101
    %v104 = vshll.u32 %v82, 16
    %v106 = vrot.slane %v104, 1
    %v107 = vsel %vm83, %v102, %v106
    %108 = vrot.lane.b32.xlu0 %v95, 32
    %v109 = vpop.permute.xlu0 %108
    %110 = vrot.lane.b32.xlu0 %v107, 32
    %v111 = vpop.permute.xlu0 %110
    %vm112 = vcmask 1046528
    %v113 = vrot.slane %v75, 1
    %v114 = vrot.slane %v81, 1
    %v115 = vsel %vm112, %v113, %v114
    %v116 = vrot.slane %v76, 1
    %v117 = vrot.slane %v82, 1
    %v118 = vsel %vm112, %v116, %v117
    %119 = vrot.lane.b32.xlu0 %v115, 64
    %v120 = vpop.permute.xlu0 %119
    %121 = vrot.lane.b32.xlu0 %v118, 64
    %v122 = vpop.permute.xlu0 %121
    %vm123 = vsmask.f32 6400
    %v124 = vrot.slane %v85, 1
    %v125 = vrot.slane %v87, 2
    %v126 = vor.u32 %v124, %v125
    %v127 = vshrl.u32 %v81, 16
    %v129 = vrot.slane %v127, 1
    %v130 = vrot.slane %v92, 2
    %v131 = vor.u32 %v129, %v130
    %v132 = vsel %vm123, %v126, %v131
    %v133 = vrot.slane %v97, 1
    %v134 = vrot.slane %v99, 2
    %v135 = vor.u32 %v133, %v134
    %v136 = vshrl.u32 %v82, 16
    %v138 = vrot.slane %v136, 1
    %v139 = vrot.slane %v104, 2
    %v140 = vor.u32 %v138, %v139
    %v141 = vsel %vm123, %v135, %v140
    %142 = vrot.lane.b32.xlu0 %v132, 96
    %v143 = vpop.permute.xlu0 %142
    %144 = vrot.lane.b32.xlu0 %v141, 96
    %v145 = vpop.permute.xlu0 %144
    %vm146 = vcmask 1045504
    %v147 = vrot.slane %v75, 2
    %v148 = vrot.slane %v81, 2
    %v149 = vsel %vm146, %v147, %v148
    %v150 = vrot.slane %v76, 2
    %v151 = vrot.slane %v82, 2
    %v152 = vsel %vm146, %v150, %v151
    %vm153 = vsmask.f32 5376
    %v154 = vrot.slane %v85, 2
    %v155 = vrot.slane %v87, 3
    %v156 = vor.u32 %v154, %v155
    %v157 = vrot.slane %v127, 2
    %v158 = vrot.slane %v92, 3
    %v159 = vor.u32 %v157, %v158
    %v160 = vsel %vm153, %v156, %v159
    %v161 = vrot.slane %v97, 2
    %v162 = vrot.slane %v99, 3
    %v163 = vor.u32 %v161, %v162
    %v164 = vrot.slane %v136, 2
    %v165 = vrot.slane %v104, 3
    %v166 = vor.u32 %v164, %v165
    %v167 = vsel %vm153, %v163, %v166
    %168 = vrot.lane.b32.xlu0 %v160, 32
    %v169 = vpop.permute.xlu0 %168
    %170 = vrot.lane.b32.xlu0 %v167, 32
    %v171 = vpop.permute.xlu0 %170
    %vm172 = vcmask 1044480
    %v173 = vrot.slane %v75, 3
    %v174 = vrot.slane %v81, 3
    %v175 = vsel %vm172, %v173, %v174
    %v176 = vrot.slane %v76, 3
    %v177 = vrot.slane %v82, 3
    %v178 = vsel %vm172, %v176, %v177
    %179 = vrot.lane.b32.xlu0 %v175, 64
    %v180 = vpop.permute.xlu0 %179
    %181 = vrot.lane.b32.xlu0 %v178, 64
    %v182 = vpop.permute.xlu0 %181
    %vm183 = vsmask.f32 4352
    %v184 = vrot.slane %v85, 3
    %v185 = vrot.slane %v87, 4
    %v186 = vor.u32 %v184, %v185
    %v187 = vrot.slane %v127, 3
    %v188 = vrot.slane %v92, 4
    %v189 = vor.u32 %v187, %v188
    %v190 = vsel %vm183, %v186, %v189
    %v191 = vrot.slane %v97, 3
    %v192 = vrot.slane %v99, 4
    %v193 = vor.u32 %v191, %v192
    %v194 = vrot.slane %v136, 3
    %v195 = vrot.slane %v104, 4
    %v196 = vor.u32 %v194, %v195
    %v197 = vsel %vm183, %v193, %v196
    %198 = vrot.lane.b32.xlu0 %v190, 96
    %v199 = vpop.permute.xlu0 %198
    %200 = vrot.lane.b32.xlu0 %v197, 96
    %v201 = vpop.permute.xlu0 %200
    %vm202 = vcmask 261120
    %v204 = vsel %vm202, %v75, %v109
    %v206 = vsel %vm202, %v76, %v111
    %vm207 = vcmask 523264
    %v209 = vsel %vm207, %v204, %v120
    %v211 = vsel %vm207, %v206, %v122
    %vm212 = vcmask 785408
    %v214 = vsel %vm212, %v209, %v143
    %v217 = vsel %vm212, %v211, %v145
    %v221 = vsel %vm202, %v149, %v169
    %v224 = vsel %vm202, %v152, %v171
    %v226 = vsel %vm207, %v221, %v180
    %v228 = vsel %vm207, %v224, %v182
    %v230 = vsel %vm212, %v226, %v199
    %v233 = vsel %vm212, %v228, %v201
    %v235 = vld [vmem:[#allocation2] sm:$0xff]
    %v236 = vld [vmem:[#allocation2 + $0x8] sm:$0xff]
    %v237 = vld [vmem:[#allocation2 + $0x10] sm:$0xff]
    %v238 = vld [vmem:[#allocation2 + $0x18] sm:$0xff]
    %v239 = vld [vmem:[#allocation2 + $0x20] sm:$0xff]
    %v240 = vld [vmem:[#allocation2 + $0x28] sm:$0xff]
    %v241 = vld [vmem:[#allocation2 + $0x30] sm:$0xff]
    %v242 = vld [vmem:[#allocation2 + $0x38] sm:$0xff]
    %v243 = vld [vmem:[#allocation2 + $0x40] sm:$0xff]
    %v244 = vld [vmem:[#allocation2 + $0x48] sm:$0xff]
    %v245 = vld [vmem:[#allocation2 + $0x50] sm:$0xff]
    %v246 = vld [vmem:[#allocation2 + $0x58] sm:$0xff]
    %v247 = vld [vmem:[#allocation2 + $0x60] sm:$0xff]
    %v248 = vld [vmem:[#allocation2 + $0x68] sm:$0xff]
    %v249 = vld [vmem:[#allocation2 + $0x70] sm:$0xff]
    %v250 = vld [vmem:[#allocation2 + $0x78] sm:$0xff]
    %v251 = vld [vmem:[#allocation2 + $0x80] sm:$0xff]
    %v252 = vld [vmem:[#allocation2 + $0x88] sm:$0xff]
    %v253 = vld [vmem:[#allocation2 + $0x90] sm:$0xff]
    %v254 = vld [vmem:[#allocation2 + $0x98] sm:$0xff]
    %v255 = vld [vmem:[#allocation2 + $0xa0] sm:$0xff]
    %v256 = vld [vmem:[#allocation2 + $0xa8] sm:$0xff]
    %v257 = vld [vmem:[#allocation2 + $0xb0] sm:$0xff]
    %v258 = vld [vmem:[#allocation2 + $0xb8] sm:$0xff]
    %v259 = vld [vmem:[#allocation2 + $0xc0] sm:$0xff]
    %v260 = vld [vmem:[#allocation2 + $0xc8] sm:$0xff]
    %v261 = vld [vmem:[#allocation2 + $0xd0] sm:$0xff]
    %v262 = vld [vmem:[#allocation2 + $0xd8] sm:$0xff]
    %v263 = vld [vmem:[#allocation2 + $0xe0] sm:$0xff]
    %v264 = vld [vmem:[#allocation2 + $0xe8] sm:$0xff]
    %v265 = vld [vmem:[#allocation2 + $0xf0] sm:$0xff]
    %v266 = vld [vmem:[#allocation2 + $0xf8] sm:$0xff]
    %v267 = vld [vmem:[%s2] sm:$0x3]
    %v269 = vperm.slane %v267, 0
    %v270 = vperm.slane %v267, 1
    %v305 = vunpack.c.l.b16 %v235
    %v306 = vunpack.c.h.b16 %v235
    %v307 = vunpack.c.l.b16 %v236
    %v308 = vunpack.c.h.b16 %v236
    %v309 = vunpack.c.l.b16 %v237
    %v310 = vunpack.c.h.b16 %v237
    %v311 = vunpack.c.l.b16 %v238
    %v312 = vunpack.c.h.b16 %v238
    %v313 = vunpack.c.l.b16 %v239
    %v314 = vunpack.c.h.b16 %v239
    %v315 = vunpack.c.l.b16 %v240
    %v316 = vunpack.c.h.b16 %v240
    %v317 = vunpack.c.l.b16 %v241
    %v318 = vunpack.c.h.b16 %v241
    %v319 = vunpack.c.l.b16 %v242
    %v320 = vunpack.c.h.b16 %v242
    %v321 = vunpack.c.l.b16 %v243
    %v322 = vunpack.c.h.b16 %v243
    %v323 = vunpack.c.l.b16 %v244
    %v324 = vunpack.c.h.b16 %v244
    %v325 = vunpack.c.l.b16 %v245
    %v326 = vunpack.c.h.b16 %v245
    %v327 = vunpack.c.l.b16 %v246
    %v328 = vunpack.c.h.b16 %v246
    %v329 = vunpack.c.l.b16 %v247
    %v330 = vunpack.c.h.b16 %v247
    %v331 = vunpack.c.l.b16 %v248
    %v332 = vunpack.c.h.b16 %v248
    %v333 = vunpack.c.l.b16 %v249
    %v334 = vunpack.c.h.b16 %v249
    %v335 = vunpack.c.l.b16 %v250
    %v336 = vunpack.c.h.b16 %v250
    %v337 = vunpack.c.l.b16 %v251
    %v338 = vunpack.c.h.b16 %v251
    %v339 = vunpack.c.l.b16 %v252
    %v340 = vunpack.c.h.b16 %v252
    %v341 = vunpack.c.l.b16 %v253
    %v342 = vunpack.c.h.b16 %v253
    %v343 = vunpack.c.l.b16 %v254
    %v344 = vunpack.c.h.b16 %v254
    %v345 = vunpack.c.l.b16 %v255
    %v346 = vunpack.c.h.b16 %v255
    %v347 = vunpack.c.l.b16 %v256
    %v348 = vunpack.c.h.b16 %v256
    %v349 = vunpack.c.l.b16 %v257
    %v350 = vunpack.c.h.b16 %v257
    %v351 = vunpack.c.l.b16 %v258
    %v352 = vunpack.c.h.b16 %v258
    %v353 = vunpack.c.l.b16 %v259
    %v354 = vunpack.c.h.b16 %v259
    %v355 = vunpack.c.l.b16 %v260
    %v356 = vunpack.c.h.b16 %v260
    %v357 = vunpack.c.l.b16 %v261
    %v358 = vunpack.c.h.b16 %v261
    %v359 = vunpack.c.l.b16 %v262
    %v360 = vunpack.c.h.b16 %v262
    %v361 = vunpack.c.l.b16 %v263
    %v362 = vunpack.c.h.b16 %v263
    %v363 = vunpack.c.l.b16 %v264
    %v364 = vunpack.c.h.b16 %v264
    %v365 = vunpack.c.l.b16 %v265
    %v366 = vunpack.c.h.b16 %v265
    %v367 = vunpack.c.l.b16 %v266
    %v368 = vunpack.c.h.b16 %v266
    %v369 = vpack.c.b16 %v307, %v305
    %v370 = vpack.c.b16 %v308, %v306
    %v371 = vpack.c.b16 %v311, %v309
    %v372 = vpack.c.b16 %v312, %v310
    %v373 = vpack.c.b16 %v315, %v313
    %v374 = vpack.c.b16 %v316, %v314
    %v375 = vpack.c.b16 %v319, %v317
    %v376 = vpack.c.b16 %v320, %v318
    %v377 = vpack.c.b16 %v323, %v321
    %v378 = vpack.c.b16 %v324, %v322
    %v379 = vpack.c.b16 %v327, %v325
    %v380 = vpack.c.b16 %v328, %v326
    %v381 = vpack.c.b16 %v331, %v329
    %v382 = vpack.c.b16 %v332, %v330
    %v383 = vpack.c.b16 %v335, %v333
    %v384 = vpack.c.b16 %v336, %v334
    %v385 = vpack.c.b16 %v339, %v337
    %v386 = vpack.c.b16 %v340, %v338
    %v387 = vpack.c.b16 %v343, %v341
    %v388 = vpack.c.b16 %v344, %v342
    %v389 = vpack.c.b16 %v347, %v345
    %v390 = vpack.c.b16 %v348, %v346
    %v391 = vpack.c.b16 %v351, %v349
    %v392 = vpack.c.b16 %v352, %v350
    %v393 = vpack.c.b16 %v355, %v353
    %v394 = vpack.c.b16 %v356, %v354
    %v395 = vpack.c.b16 %v359, %v357
    %v396 = vpack.c.b16 %v360, %v358
    %v397 = vpack.c.b16 %v363, %v361
    %v398 = vpack.c.b16 %v364, %v362
    %v399 = vpack.c.b16 %v367, %v365
    %v400 = vpack.c.b16 %v368, %v366
    %433 = vmatpush.bf16.msra.mxu0 %v383
    %434 = vmatpush.bf16.msra.mxu0 %v381
    %435 = vmatpush.bf16.msra.mxu0 %v379
    %436 = vmatpush.bf16.msra.mxu0 %v377
    %437 = vmatpush.bf16.msra.mxu0 %v375
    %438 = vmatpush.bf16.msra.mxu0 %v373
    %439 = vmatpush.bf16.msra.mxu0 %v371
    %440 = vmatpush.bf16.msra.mxu0 %v369
    %441 = vmatmul.bf16.gmra.mxu0 %v214
    %v442 = vpop.f32.mrf.mxu0
    %v443 = vadd.f32 %v269, %v442
    %v444 = vpop.f32.mrf.mxu0
    %v445 = vadd.f32 %v269, %v444
    %446 = vmatmul.bf16.gmra.mxu0 %v217
    %v447 = vpop.f32.mrf.mxu0
    %v448 = vadd.f32 %v269, %v447
    %v449 = vpop.f32.mrf.mxu0
    %v450 = vadd.f32 %v269, %v449
    %451 = vdwg.mxu0
    %452 = vmatpush.bf16.msra.mxu0 %v399
    %453 = vmatpush.bf16.msra.mxu0 %v397
    %454 = vmatpush.bf16.msra.mxu0 %v395
    %455 = vmatpush.bf16.msra.mxu0 %v393
    %456 = vmatpush.bf16.msra.mxu0 %v391
    %457 = vmatpush.bf16.msra.mxu0 %v389
    %458 = vmatpush.bf16.msra.mxu0 %v387
    %459 = vmatpush.bf16.msra.mxu0 %v385
    %460 = vmatmul.bf16.gmra.mxu0 %v230
    %v461 = vpop.f32.mrf.mxu0
    %v462 = vadd.f32 %v443, %v461
    %v463 = vpop.f32.mrf.mxu0
    %v464 = vadd.f32 %v445, %v463
    %465 = vmatmul.bf16.gmra.mxu0 %v233
    %v466 = vpop.f32.mrf.mxu0
    %v467 = vadd.f32 %v448, %v466
    %v468 = vpop.f32.mrf.mxu0
    %v469 = vadd.f32 %v450, %v468
    %470 = vdwg.mxu0
    %471 = vmatpush.bf16.msra.mxu0 %v384
    %472 = vmatpush.bf16.msra.mxu0 %v382
    %473 = vmatpush.bf16.msra.mxu0 %v380
    %474 = vmatpush.bf16.msra.mxu0 %v378
    %475 = vmatpush.bf16.msra.mxu0 %v376
    %476 = vmatpush.bf16.msra.mxu0 %v374
    %477 = vmatpush.bf16.msra.mxu0 %v372
    %478 = vmatpush.bf16.msra.mxu0 %v370
    %479 = vmatmul.bf16.gmra.mxu0 %v214
    %v480 = vpop.f32.mrf.mxu0
    %v481 = vadd.f32 %v270, %v480
    %v482 = vpop.f32.mrf.mxu0
    %v483 = vadd.f32 %v270, %v482
    %484 = vmatmul.bf16.gmra.mxu0 %v217
    %v485 = vpop.f32.mrf.mxu0
    %v486 = vadd.f32 %v270, %v485
    %v487 = vpop.f32.mrf.mxu0
    %v488 = vadd.f32 %v270, %v487
    %489 = vdwg.mxu0
    %490 = vmatpush.bf16.msra.mxu0 %v400
    %491 = vmatpush.bf16.msra.mxu0 %v398
    %492 = vmatpush.bf16.msra.mxu0 %v396
    %493 = vmatpush.bf16.msra.mxu0 %v394
    %494 = vmatpush.bf16.msra.mxu0 %v392
    %495 = vmatpush.bf16.msra.mxu0 %v390
    %496 = vmatpush.bf16.msra.mxu0 %v388
    %497 = vmatpush.bf16.msra.mxu0 %v386
    %498 = vmatmul.bf16.gmra.mxu0 %v230
    %v499 = vpop.f32.mrf.mxu0
    %v500 = vadd.f32 %v481, %v499
    %v501 = vpop.f32.mrf.mxu0
    %v502 = vadd.f32 %v483, %v501
    %503 = vmatmul.bf16.gmra.mxu0 %v233
    %v504 = vpop.f32.mrf.mxu0
    %v505 = vadd.f32 %v486, %v504
    %v506 = vpop.f32.mrf.mxu0
    %v507 = vadd.f32 %v488, %v506
    %508 = vdwg.mxu0
    %vm509 = vcmp.gt.f32.partialorder %v462, 0.0
    %vm510 = vcmp.gt.f32.partialorder %v500, 0.0
    %vm511 = vcmp.gt.f32.partialorder %v464, 0.0
    %vm512 = vcmp.gt.f32.partialorder %v502, 0.0
    %vm513 = vcmp.gt.f32.partialorder %v467, 0.0
    %vm514 = vcmp.gt.f32.partialorder %v505, 0.0
    %vm515 = vcmp.gt.f32.partialorder %v469, 0.0
    %vm516 = vcmp.gt.f32.partialorder %v507, 0.0
    %v517 = vmul.f32 %v462, 0.2
    %v518 = vmul.f32 %v500, 0.2
    %v519 = vmul.f32 %v464, 0.2
    %v520 = vmul.f32 %v502, 0.2
    %v521 = vmul.f32 %v467, 0.2
    %v522 = vmul.f32 %v505, 0.2
    %v523 = vmul.f32 %v469, 0.2
    %v524 = vmul.f32 %v507, 0.2
    %v525 = vsel %vm509, %v462, %v517
    %v526 = vsel %vm510, %v500, %v518
    %v527 = vsel %vm511, %v464, %v519
    %v528 = vsel %vm512, %v502, %v520
    %v529 = vsel %vm513, %v467, %v521
    %v530 = vsel %vm514, %v505, %v522
    %v531 = vsel %vm515, %v469, %v523
    %v532 = vsel %vm516, %v507, %v524
    %v533 = vld [vmem:[%s3] sm:$0xff]
    %v534 = vld [vmem:[%s3 + $0x8] sm:$0xff]
    %v535 = vld [vmem:[%s3 + $0x10] sm:$0xff]
    %v536 = vld [vmem:[%s3 + $0x18] sm:$0xff]
    %v537 = vadd.f32 %v525, %v533
    %v538 = vadd.f32 %v526, %v534
    %v539 = vadd.f32 %v527, %v535
    %v540 = vadd.f32 %v528, %v536
    %v541 = vadd.f32 %v529, %v533
    %v542 = vadd.f32 %v530, %v534
    %v543 = vadd.f32 %v531, %v535
    %v544 = vadd.f32 %v532, %v536
    %v545 = vmax.f32 %v537, %v539
    %v546 = vrot.slane %v545, 4
    %v547 = vmax.f32 %v545, %v546
    %v548 = vrot.slane %v547, 2
    %v549 = vmax.f32 %v547, %v548
    %v550 = vrot.slane %v549, 1
    %v551 = vmax.f32 %v549, %v550
    %v552 = vmax.f32 %v538, %v540
    %v553 = vrot.slane %v552, 4
    %v554 = vmax.f32 %v552, %v553
    %v555 = vrot.slane %v554, 2
    %v556 = vmax.f32 %v554, %v555
    %v557 = vrot.slane %v556, 1
    %v558 = vmax.f32 %v556, %v557
    %v559 = vmax.f32 %v541, %v543
    %v560 = vrot.slane %v559, 4
    %v561 = vmax.f32 %v559, %v560
    %v562 = vrot.slane %v561, 2
    %v563 = vmax.f32 %v561, %v562
    %v564 = vrot.slane %v563, 1
    %v565 = vmax.f32 %v563, %v564
    %v566 = vmax.f32 %v542, %v544
    %v567 = vrot.slane %v566, 4
    %v568 = vmax.f32 %v566, %v567
    %v569 = vrot.slane %v568, 2
    %v570 = vmax.f32 %v568, %v569
    %v571 = vrot.slane %v570, 1
    %v572 = vmax.f32 %v570, %v571
    %v573 = vpack.c.bf16 %v551, %v551
    %v574 = vpack.c.bf16 %v558, %v558
    %v575 = vpack.c.bf16 %v565, %v565
    %v576 = vpack.c.bf16 %v572, %v572
    %v577 = vld [vmem:[#allocation4] sm:$0xf]
    %v578 = vld [vmem:[#allocation4 + $0x4] sm:$0xf]
    %v579 = vld [vmem:[#allocation4 + $0x8] sm:$0xf]
    %v580 = vld [vmem:[#allocation4 + $0xc] sm:$0xf]
    %v581 = vld [vmem:[#allocation4 + $0x10] sm:$0xf]
    %v582 = vld [vmem:[#allocation4 + $0x14] sm:$0xf]
    %v583 = vld [vmem:[#allocation4 + $0x18] sm:$0xf]
    %v584 = vld [vmem:[#allocation4 + $0x1c] sm:$0xf]
    %v585 = vld [vmem:[#allocation4 + $0x20] sm:$0xf]
    %v586 = vld [vmem:[#allocation4 + $0x24] sm:$0xf]
    %v587 = vld [vmem:[#allocation4 + $0x28] sm:$0xf]
    %v588 = vld [vmem:[#allocation4 + $0x2c] sm:$0xf]
    %v589 = vld [vmem:[#allocation4 + $0x30] sm:$0xf]
    %v590 = vld [vmem:[#allocation4 + $0x34] sm:$0xf]
    %v591 = vld [vmem:[#allocation4 + $0x38] sm:$0xf]
    %v592 = vld [vmem:[#allocation4 + $0x3c] sm:$0xf]
    %v593 = vld [vmem:[#allocation4 + $0x40] sm:$0xf]
    %v594 = vld [vmem:[#allocation4 + $0x44] sm:$0xf]
    %v595 = vld [vmem:[#allocation4 + $0x48] sm:$0xf]
    %v596 = vld [vmem:[#allocation4 + $0x4c] sm:$0xf]
    %v597 = vld [vmem:[#allocation4 + $0x50] sm:$0xf]
    %v598 = vld [vmem:[#allocation4 + $0x54] sm:$0xf]
    %v599 = vld [vmem:[#allocation4 + $0x58] sm:$0xf]
    %v600 = vld [vmem:[#allocation4 + $0x5c] sm:$0xf]
    %v601 = vld [vmem:[#allocation4 + $0x60] sm:$0xf]
    %v602 = vld [vmem:[#allocation4 + $0x64] sm:$0xf]
    %v603 = vld [vmem:[#allocation4 + $0x68] sm:$0xf]
    %v604 = vld [vmem:[#allocation4 + $0x6c] sm:$0xf]
    %v605 = vld [vmem:[#allocation4 + $0x70] sm:$0xf]
    %v606 = vld [vmem:[#allocation4 + $0x74] sm:$0xf]
    %v607 = vld [vmem:[#allocation4 + $0x78] sm:$0xf]
    %v608 = vld [vmem:[#allocation4 + $0x7c] sm:$0xf]
    %v609 = vld [vmem:[%s5] sm:$0x1]
    %v611 = vperm.slane %v609, 0
    %v617 = vunpack.c.l.b16 %v573
    %v618 = vunpack.c.l.b16 %v574
    %v619 = vunpack.c.l.b16 %v575
    %v620 = vunpack.c.l.b16 %v576
    %vm621 = vcmask 1041409
    %v622 = vsel %vm621, %v619, %v617
    %v623 = vsel %vm621, %v620, %v618
    %v624 = vpack.c.b16 %v622, %v622
    %v625 = vpack.c.b16 %v623, %v623
    %v660 = vunpack.c.l.b16 %v577
    %v661 = vunpack.c.l.b16 %v578
    %v662 = vunpack.c.l.b16 %v579
    %v663 = vunpack.c.l.b16 %v580
    %v664 = vunpack.c.l.b16 %v581
    %v665 = vunpack.c.l.b16 %v582
    %v666 = vunpack.c.l.b16 %v583
    %v667 = vunpack.c.l.b16 %v584
    %v668 = vunpack.c.l.b16 %v585
    %v669 = vunpack.c.l.b16 %v586
    %v670 = vunpack.c.l.b16 %v587
    %v671 = vunpack.c.l.b16 %v588
    %v672 = vunpack.c.l.b16 %v589
    %v673 = vunpack.c.l.b16 %v590
    %v674 = vunpack.c.l.b16 %v591
    %v675 = vunpack.c.l.b16 %v592
    %v676 = vunpack.c.l.b16 %v593
    %v677 = vunpack.c.l.b16 %v594
    %v678 = vunpack.c.l.b16 %v595
    %v679 = vunpack.c.l.b16 %v596
    %v680 = vunpack.c.l.b16 %v597
    %v681 = vunpack.c.l.b16 %v598
    %v682 = vunpack.c.l.b16 %v599
    %v683 = vunpack.c.l.b16 %v600
    %v684 = vunpack.c.l.b16 %v601
    %v685 = vunpack.c.l.b16 %v602
    %v686 = vunpack.c.l.b16 %v603
    %v687 = vunpack.c.l.b16 %v604
    %v688 = vunpack.c.l.b16 %v605
    %v689 = vunpack.c.l.b16 %v606
    %v690 = vunpack.c.l.b16 %v607
    %v691 = vunpack.c.l.b16 %v608
    %v692 = vpack.c.b16 %v661, %v660
    %v693 = vpack.c.b16 %v663, %v662
    %v694 = vpack.c.b16 %v665, %v664
    %v695 = vpack.c.b16 %v667, %v666
    %v696 = vpack.c.b16 %v669, %v668
    %v697 = vpack.c.b16 %v671, %v670
    %v698 = vpack.c.b16 %v673, %v672
    %v699 = vpack.c.b16 %v675, %v674
    %v700 = vpack.c.b16 %v677, %v676
    %v701 = vpack.c.b16 %v679, %v678
    %v702 = vpack.c.b16 %v681, %v680
    %v703 = vpack.c.b16 %v683, %v682
    %v704 = vpack.c.b16 %v685, %v684
    %v705 = vpack.c.b16 %v687, %v686
    %v706 = vpack.c.b16 %v689, %v688
    %v707 = vpack.c.b16 %v691, %v690
    %724 = vmatpush.bf16.msra.mxu0 %v699
    %725 = vmatpush.bf16.msra.mxu0 %v698
    %726 = vmatpush.bf16.msra.mxu0 %v697
    %727 = vmatpush.bf16.msra.mxu0 %v696
    %728 = vmatpush.bf16.msra.mxu0 %v695
    %729 = vmatpush.bf16.msra.mxu0 %v694
    %730 = vmatpush.bf16.msra.mxu0 %v693
    %731 = vmatpush.bf16.msra.mxu0 %v692
    %732 = vmatmul.bf16.gmra.mxu0 %v624
    %v733 = vpop.f32.mrf.mxu0
    %v734 = vadd.f32 %v611, %v733
    %v735 = vpop.f32.mrf.mxu0
    %736 = vdwg.mxu0
    %737 = vmatpush.bf16.msra.mxu0 %v707
    %738 = vmatpush.bf16.msra.mxu0 %v706
    %739 = vmatpush.bf16.msra.mxu0 %v705
    %740 = vmatpush.bf16.msra.mxu0 %v704
    %741 = vmatpush.bf16.msra.mxu0 %v703
    %742 = vmatpush.bf16.msra.mxu0 %v702
    %743 = vmatpush.bf16.msra.mxu0 %v701
    %744 = vmatpush.bf16.msra.mxu0 %v700
    %745 = vmatmul.bf16.gmra.mxu0 %v625
    %v746 = vpop.f32.mrf.mxu0
    %v747 = vadd.f32 %v734, %v746
    %v748 = vpop.f32.mrf.mxu0
    %749 = vdwg.mxu0
    %vm750 = vcmp.gt.f32.partialorder %v747, 0.0
    %v751 = vmul.f32 %v747, 0.2
    %v752 = vsel %vm750, %v747, %v751
    %v753 = vpack.c.bf16 %v752, %v752
    %v754 = vld [vmem:[%s6] sm:$0xf]
    %v755 = vld [vmem:[%s6 + $0x4] sm:$0xf]
    %v756 = vld [vmem:[%s6 + $0x8] sm:$0xf]
    %v757 = vld [vmem:[%s6 + $0xc] sm:$0xf]
    %v758 = vld [vmem:[%s6 + $0x10] sm:$0xf]
    %v759 = vld [vmem:[%s6 + $0x14] sm:$0xf]
    %v760 = vld [vmem:[%s6 + $0x18] sm:$0xf]
    %v761 = vld [vmem:[%s6 + $0x1c] sm:$0xf]
    %v762 = vld [vmem:[%s6 + $0x20] sm:$0xf]
    %v763 = vld [vmem:[%s6 + $0x24] sm:$0xf]
    %v764 = vld [vmem:[%s6 + $0x28] sm:$0xf]
    %v765 = vld [vmem:[%s6 + $0x2c] sm:$0xf]
    %v766 = vld [vmem:[%s6 + $0x30] sm:$0xf]
    %v767 = vld [vmem:[%s6 + $0x34] sm:$0xf]
    %v768 = vld [vmem:[%s6 + $0x38] sm:$0xf]
    %v769 = vld [vmem:[%s6 + $0x3c] sm:$0xf]
    %v770 = vld [vmem:[%s7] sm:$0x1]
    %v772 = vperm.slane %v770, 0
    %v790 = vunpack.c.l.b16 %v754
    %v791 = vunpack.c.l.b16 %v755
    %v792 = vunpack.c.l.b16 %v756
    %v793 = vunpack.c.l.b16 %v757
    %v794 = vunpack.c.l.b16 %v758
    %v795 = vunpack.c.l.b16 %v759
    %v796 = vunpack.c.l.b16 %v760
    %v797 = vunpack.c.l.b16 %v761
    %v798 = vunpack.c.l.b16 %v762
    %v799 = vunpack.c.l.b16 %v763
    %v800 = vunpack.c.l.b16 %v764
    %v801 = vunpack.c.l.b16 %v765
    %v802 = vunpack.c.l.b16 %v766
    %v803 = vunpack.c.l.b16 %v767
    %v804 = vunpack.c.l.b16 %v768
    %v805 = vunpack.c.l.b16 %v769
    %v806 = vpack.c.b16 %v791, %v790
    %v807 = vpack.c.b16 %v793, %v792
    %v808 = vpack.c.b16 %v795, %v794
    %v809 = vpack.c.b16 %v797, %v796
    %v810 = vpack.c.b16 %v799, %v798
    %v811 = vpack.c.b16 %v801, %v800
    %v812 = vpack.c.b16 %v803, %v802
    %v813 = vpack.c.b16 %v805, %v804
    %822 = vmatpush.bf16.msra.mxu0 %v813
    %823 = vmatpush.bf16.msra.mxu0 %v812
    %824 = vmatpush.bf16.msra.mxu0 %v811
    %825 = vmatpush.bf16.msra.mxu0 %v810
    %826 = vmatpush.bf16.msra.mxu0 %v809
    %827 = vmatpush.bf16.msra.mxu0 %v808
    %828 = vmatpush.bf16.msra.mxu0 %v807
    %829 = vmatpush.bf16.msra.mxu0 %v806
    %830 = vmatmul.bf16.gmra.mxu0 %v753
    %v831 = vpop.f32.mrf.mxu0
    %v832 = vadd.f32 %v772, %v831
    %v833 = vpop.f32.mrf.mxu0
    %834 = vdwg.mxu0
    %v835 = vlaneseq
    %v836 = vand.u32 %v835, 127
    %vm837 = vcmp.lt.s32.totalorder %v836, 3
    %vm838 = vcmp.ge.s32.totalorder %v836, 64
    %vm839 = vcmp.lt.s32.totalorder %v836, 67
    %vm840 = vmand %vm838, %vm839
    %v841 = vsel %vm840, %v832, -1e+30
    %vm842 = vcmask 1041408
    %v843 = vsel %vm842, %v841, -inf
    %844 = vmax.xlane.f32.xlu0 %v843
    %v845 = vpop.xlane.xlu0 %844
    %v846 = vsub.f32 %v841, %v845
    %v847 = vmul.f32 %v846, 1.442695
    %v848 = vpow.pop %v847
    %v849 = vsel %vm842, %v848, 0.0
    %850 = vadd.xlane.f32.xlu0 %v849
    %v851 = vpop.xlane.xlu0 %850
    %v852 = vrcp.pop %v851
    %v853 = vmul.f32 %v851, %v852
    %v854 = vsub.f32 1.0, %v853
    %v855 = vmul.f32 %v852, %v854
    %v856 = vadd.f32 %v852, %v855
    %vm857 = vweird.f32 %v851
    %vm858 = vweird.f32 %v852
    %vm859 = vmor %vm857, %vm858
    %v860 = vsel %vm859, %v852, %v856
    %v861 = vand.u32 2147483647, %v851
    %vm862 = vcmp.eq.f32.partialorder %v861, 8.507059e+37
    %v863 = vand.u32 %v851, 2147483648
    %v864 = vor.u32 1.1754944e-38, %v863
    %v865 = vsel %vm862, %v864, %v860
    %v866 = vmul.f32 %v848, %v865
    %v867 = vsel %vm837, %v832, 0.0
    %v868 = vadd.f32 %v867, %v866
    %869 = vst [vmem:[%s8] sm:$0x3] %v868
    // Predicated region
    $region42: #{discriminator_forward.1} parent=1 // pred_check
      _
    $region43: #{discriminator_forward.1} parent=1 // pred_check_branch
      %871 = sbr.rel (0) target = $region45
    $region44: #{discriminator_forward.1} parent=1 // pred_region
      _
    $region45: #{discriminator_forward.1} parent=1 // pred_fallthru
      _
    // Predicated region
    $region46: #{discriminator_forward.1} parent=1 // pred_check
      _
    $region47: #{discriminator_forward.1} parent=1 // pred_check_branch
      %873 = sbr.rel (0) target = $region49
    $region48: #{discriminator_forward.1} parent=1 // pred_region
      _
    $region49: #{discriminator_forward.1} parent=1 // pred_fallthru
      _
    %874 = vsyncpa [#allocation3], 1
    %875 = vsyncpa [#allocation5], 1

</llo_original>
